<compile_context>
chip_gen: v7x
topology: tpu7x:2x2x1
jax: 0.10.0
libtpu: 0.0.40
codegen_flags: <defaults>
</compile_context>

<pallas_src>
import jax
import jax.numpy as jnp
from jax.experimental import pallas as pl
from jax.experimental.pallas import tpu as pltpu


def _identity_copy_kernel(x_ref, o_ref):
    # Pure pass-through of the current VMEM tile.
    o_ref[...] = x_ref[...]


# Sub-32-bit dtypes pack along sublanes; align row tiles to the packing factor.
_SUBLANE_PACK_BY_ITEMSIZE = {4: 8, 2: 16, 1: 32}
# ~2 MiB per block -> (2 in + 2 out) double-buffered ~8 MiB: fits every scoped
# VMEM default (v5e 16 MiB, v6e/v7x 32 MiB) while amortizing ~0.35 us/step.
_TARGET_BLOCK_BYTES = 2 * 1024 * 1024
# Candidate lane-dense widths (large multiples of 128 preferred).
_LANE_WIDTHS = (4096, 2048, 1024, 512, 256, 128)


def _pack_factor(dtype) -> int:
    return _SUBLANE_PACK_BY_ITEMSIZE.get(jnp.dtype(dtype).itemsize, 8)


def _choose_tile_rows(rows: int, row_bytes: int, pack: int) -> int:
    """Largest row tile near the target block size, aligned to `pack` rows."""
    t = _TARGET_BLOCK_BYTES // max(row_bytes, 1)
    if t >= rows:
        return rows                      # full-extent block: always legal
    return max(pack, (t // pack) * pack)  # multiple of sublane packing


def _copy_2d(x2d: jax.Array) -> jax.Array:
    rows, cols = x2d.shape
    itemsize = jnp.dtype(x2d.dtype).itemsize
    pack = _pack_factor(x2d.dtype)
    tile_rows = _choose_tile_rows(rows, cols * itemsize, pack)
    grid = (pl.cdiv(rows, tile_rows),)   # ragged last block handled by Pallas

    return pl.pallas_call(
        _identity_copy_kernel,
        out_shape=jax.ShapeDtypeStruct((rows, cols), x2d.dtype),
        grid_spec=pltpu.PrefetchScalarGridSpec(
            num_scalar_prefetch=0,
            grid=grid,
            in_specs=[pl.BlockSpec((tile_rows, cols), lambda i: (i, 0))],
            out_specs=pl.BlockSpec((tile_rows, cols), lambda i: (i, 0)),
        ),
        compiler_params=pltpu.CompilerParams(
            # 'parallel' lets Mosaic shard the copy across both v7x TCs;
            # harmless on single-TC v5e/v6e.
            dimension_semantics=("parallel",),
            vmem_limit_bytes=32 * 1024 * 1024,
        ),
        cost_estimate=pl.CostEstimate(
            flops=0,
            transcendentals=0,
            bytes_accessed=2 * rows * cols * itemsize,
        ),
    )(x2d)


def no_embedding_forward(x: jax.Array) -> jax.Array:
    """Identity 'embedding': returns a copy of x computed via a Pallas kernel.

    Accepts any shape / dtype. Bit-exact with the input.
    """
    # Note: the truly optimal Identity is `return x` (no kernel, no HBM
    # traffic). We keep the kernel path to provide a materialized output.
    if x.ndim == 0 or x.size == 0:
        return x

    n = x.size

    # Lane-dense fast path: reshape to (rows, C) with C a large multiple of
    # 128 so every store is a full-width, unmasked vst (biggest measured
    # lever for mem-bound kernels). Pure layout plumbing -> still bit-exact.
    for width in _LANE_WIDTHS:
        if n % width == 0:
            y = _copy_2d(x.reshape(n // width, width))
            return y.reshape(x.shape)

    # Fallback (size not divisible by 128): keep the natural
    # (leading-dims-flattened, last-dim) layout; last dim is a full-extent
    # block, row axis tiled with a cdiv grid (no whole-array fallback).
    cols = x.shape[-1]
    rows = n // cols
    y = _copy_2d(x.reshape(rows, cols))
    return y.reshape(x.shape)


class NoEmbedding:
    """JAX/Pallas mirror of dwi_ml NoEmbedding (no parameters)."""

    def __init__(self, nb_features_in: int, nb_features_out: int | None = None):
        if nb_features_out is not None:
            assert nb_features_in == nb_features_out
        self.nb_features_in = nb_features_in
        self.key = "no_embedding"

    def __call__(self, inputs: jax.Array) -> jax.Array:
        return no_embedding_forward(inputs)


if __name__ == "__main__":
    key = jax.random.PRNGKey(0)

    # Primary small shape consistent with the module: (seq, nb_features_in).
    seq, nb_features_in = 8, 32
    x = jax.random.normal(key, (seq, nb_features_in), dtype=jnp.float32)

    model = NoEmbedding(nb_features_in, nb_features_in)
    y = jax.block_until_ready(model(x))
    assert y.shape == x.shape and y.dtype == x.dtype
    assert bool(jnp.all(y == x))

    # Exercise the ragged / non-128-divisible fallback path (robustness).
    k2 = jax.random.PRNGKey(0)
    x2 = jax.random.normal(k2, (37, 5), dtype=jnp.float32)
    y2 = jax.block_until_ready(no_embedding_forward(x2))
    assert y2.shape == x2.shape and y2.dtype == x2.dtype
    assert bool(jnp.all(y2 == x2))

    # Exercise a packed (bf16) dtype through the lane-dense path.
    x3 = jax.random.normal(jax.random.PRNGKey(0), (16, 32)).astype(jnp.bfloat16)
    y3 = jax.block_until_ready(no_embedding_forward(x3))
    assert y3.shape == x3.shape and y3.dtype == x3.dtype
    assert bool(jnp.all(y3 == x3))

    print("KERNEL_OK")
</pallas_src>

<mosaic_0001>
module attributes {stable_mosaic.version = 11 : i64} {
  func.func @_identity_copy_kernel(%arg0: i32, %arg1: memref<1x256xf32, #tpu.memory_space<vmem>>, %arg2: memref<1x256xf32, #tpu.memory_space<vmem>>) attributes {dimension_semantics = [#tpu.dimension_semantics<parallel>], iteration_bounds = array<i64: 1>, scalar_prefetch = 0 : i64, scratch_operands = 0 : i64, tpu.core_type = #tpu.core_type<tc>, window_params = [{transform_indices = @transform_0, window_bounds = array<i64: 1, 256>}, {transform_indices = @transform_1, window_bounds = array<i64: 1, 256>}]} {
    %c0 = arith.constant 0 : index
    %c0_0 = arith.constant 0 : index
    %0 = vector.load %arg1[%c0, %c0_0] : memref<1x256xf32, #tpu.memory_space<vmem>>, vector<1x256xf32>
    %c0_1 = arith.constant 0 : index
    %c0_2 = arith.constant 0 : index
    %1 = vector.load %arg2[%c0_1, %c0_2] : memref<1x256xf32, #tpu.memory_space<vmem>>, vector<1x256xf32>
    tpu.vector_store %arg2[%c0_1, %c0_2], %0 {strides = array<i32>} : memref<1x256xf32, #tpu.memory_space<vmem>>, vector<1x256xf32>,
    return
  }
  func.func @transform_0(%arg0: i32) -> (i32, i32) {
    %c0_i32 = arith.constant 0 : i32
    %c0_i32_0 = arith.constant 0 : i32
    return %arg0, %c0_i32 : i32, i32
  }
  func.func @transform_1(%arg0: i32) -> (i32, i32) {
    %c0_i32 = arith.constant 0 : i32
    %c0_i32_0 = arith.constant 0 : i32
    return %arg0, %c0_i32 : i32, i32
  }
}

</mosaic_0001>

<llo_original>
// kernel: tpu_custom_call.1
$region0: #{tpu_custom_call.1}
  #allocation0 [shape = 'u32[]', space=smem, size = 0x4, offset = 0x4, fixed_abs, tag = 'smem constant byte address 0x4 - core index']
  #allocation1 [shape = 'u32[144,128]{1,0:T(1,128)}', space=vmem, size = 0x12000, scoped, tag = 'internal scratch']
  %s0 = inlined_call_operand.hbm [shape: f32[1,256], index: 0, kind: input, shape index: {}]
  %s1 = inlined_call_operand.hbm [shape: f32[1,256], index: 1, kind: output, shape index: {}]
  %s2 = sld [smem:[#allocation0]]
  $region18: #{tpu_custom_call.1} parent=0
    _
  %s4 = ssub.s32 1, %s2
  %s5 = scalar_select 0, %s4, %s2
  $region1: #{tpu_custom_call.1} parent=0
    #allocation2 [shape = 'u8[1024]{0}', space=vmem, size = 0x400, scoped, tag = 'input window, operand 0, single buffered']
    #allocation3 [shape = 's32[1]{0}', space=sflag, size = 0x4, scoped, tag = 'scoped memory for tpu_custom_call.1']
    #allocation4 [shape = 's32[1]{0}', space=sflag, size = 0x4, scoped, tag = 'scoped memory for tpu_custom_call.1']
    #allocation5 [shape = 'u8[1024]{0}', space=vmem, size = 0x400, scoped, tag = 'output window, operand 0, single buffered']
    %6 = vsyncpa [#allocation3], 0
    %7 = vsyncpa [#allocation4], 0
    // Predicated region
    $region2: #{tpu_custom_call.1} parent=1 // pred_check
      _
    $region3: #{tpu_custom_call.1} parent=1 // pred_check_branch
      %9 = sbr.rel (0) target = $region5
    $region4: #{tpu_custom_call.1} parent=1 // pred_region
      %s11 = ssub.s32 32, 32
      %12 = vsyncadd [#allocation3], %s11
      %s14 = sshll.u32 [#allocation2], 4
      %s15 = int_to_ptr.vmem [resolvable:$true] %s14
      %17 = dma.hbm_to_vmem [thread:$0]  %s0, 32, %s15, [#allocation3]
    $region5: #{tpu_custom_call.1} parent=1 // pred_fallthru
      _
    // Predicated region
    $region6: #{tpu_custom_call.1} parent=1 // pred_check
      _
    $region7: #{tpu_custom_call.1} parent=1 // pred_check_branch
      %19 = sbr.rel (0) target = $region9
    $region8: #{tpu_custom_call.1} parent=1 // pred_region
      %20 = dma.done [#allocation3], 32
    $region9: #{tpu_custom_call.1} parent=1 // pred_fallthru
      _
    %v21 = vld [vmem:[#allocation2] sm:$0x3]
    %v22 = vlaneseq
    %vm23 = vcmp.ge.s32.totalorder %v22, 0
    %vm24 = vcmp.lt.s32.totalorder %v22, 256
    %vm25 = vmand %vm23, %vm24
    %26 = vst.msk [vmem:[#allocation5] sm:$0x3] %vm25, %v21
    // Predicated region
    $region10: #{tpu_custom_call.1} parent=1 // pred_check
      _
    $region11: #{tpu_custom_call.1} parent=1 // pred_check_branch
      %28 = sbr.rel (0) target = $region13
    $region12: #{tpu_custom_call.1} parent=1 // pred_region
      %s30 = ssub.s32 32, 32
      %31 = vsyncadd [#allocation4], %s30
      %s33 = sshll.u32 [#allocation5], 4
      %s34 = int_to_ptr.vmem [resolvable:$true] %s33
      %36 = dma.vmem_to_hbm [thread:$0]  %s34, 32, %s1, [#allocation4]
    $region13: #{tpu_custom_call.1} parent=1 // pred_fallthru
      _
    // Predicated region
    $region14: #{tpu_custom_call.1} parent=1 // pred_check
      _
    $region15: #{tpu_custom_call.1} parent=1 // pred_check_branch
      %38 = sbr.rel (0) target = $region17
    $region16: #{tpu_custom_call.1} parent=1 // pred_region
      %39 = dma.done [#allocation4], 32
    $region17: #{tpu_custom_call.1} parent=1 // pred_fallthru
      _
    %40 = vsyncpa [#allocation3], 1
    %41 = vsyncpa [#allocation4], 1

</llo_original>
